<compile_context>
chip_gen: v5e
topology: v5e:2x2
jax: 0.10.0
libtpu: 0.0.40
codegen_flags: <defaults>
</compile_context>

<pallas_src>
import jax
import jax.numpy as jnp
from jax.experimental import pallas as pl
from jax.experimental.pallas import tpu as pltpu


def _round_up(v, m):
    return ((v + m - 1) // m) * m


def _linear_flatten_kernel(x_ref, w_ref, b_ref, o_ref):
    # x_ref: (3, 1, 8, L) VMEM   w_ref: (3,) SMEM   b_ref: (1,) SMEM   o_ref: (1, 8, L) VMEM
    w0 = w_ref[0]
    w1 = w_ref[1]
    w2 = w_ref[2]
    b = b_ref[0]
    # y[n] = w0*x0[n] + w1*x1[n] + w2*x2[n] + b  -- full-density VPU FMAs, lane-dense store.
    o_ref[0] = w0 * x_ref[0, 0] + w1 * x_ref[1, 0] + w2 * x_ref[2, 0] + b


def transform_net_forward(x, weight, bias, *, tile_max=1 << 20):
    """Pallas implementation of TransformNet.forward.

    x:      (N, 3) float32
    weight: (1, 3) float32  (nn.Linear(3, 1).weight)
    bias:   (1,)   float32  (nn.Linear(3, 1).bias)
    returns (N,)   float32  (Linear -> Flatten(0, 1))
    """
    n = x.shape[0]
    assert x.shape[1] == 3
    assert tile_max >= 1024 and tile_max % 1024 == 0, "tile_max must be a multiple of 1024"

    vreg = 1024                                   # 8 sublanes * 128 lanes (f32)
    n_1024 = _round_up(n, vreg)

    # Balanced tiling: enough blocks to respect tile_max, and at least min(4, ...) blocks so
    # both v7x TensorCores get grid steps; tile rounded up to a whole (8,128) vreg multiple.
    min_blocks = min(4, n_1024 // vreg)
    n_blocks = max(pl.cdiv(n_1024, tile_max), min_blocks, 1)
    tile = _round_up(pl.cdiv(n_1024, n_blocks), vreg)
    n_pad = n_blocks * tile
    lane = tile // 8                              # lanes per sublane row of a block

    # One-time layout plumbing: pad rows with zeros (harmless, sliced off below), transpose to
    # channels-first, and do a free contiguous reshape to the densified (3, n_blocks, 8, lane)
    # slab.  allow_input_fusion below lets XLA fuse this producer into the pallas operand.
    x_t = (
        jnp.pad(x.astype(jnp.float32), ((0, n_pad - n), (0, 0)))
        .T.reshape(3, n_blocks, 8, lane)
    )
    w = weight.reshape(3).astype(jnp.float32)
    b = bias.reshape(1).astype(jnp.float32)

    cost = pl.CostEstimate(
        flops=6 * n_pad,               # 3 mul + 3 add per element
        transcendentals=0,
        bytes_accessed=16 * n_pad,     # 12 B read + 4 B write per element
    )

    y = pl.pallas_call(
        _linear_flatten_kernel,
        out_shape=jax.ShapeDtypeStruct((n_blocks, 8, lane), jnp.float32),
        grid=(n_blocks,),
        in_specs=[
            pl.BlockSpec((3, 1, 8, lane), lambda i: (0, i, 0, 0)),        # x tile (VMEM, dense)
            pl.BlockSpec(memory_space=pltpu.MemorySpace.SMEM),            # weight scalars
            pl.BlockSpec(memory_space=pltpu.MemorySpace.SMEM),            # bias scalar
        ],
        out_specs=pl.BlockSpec((1, 8, lane), lambda i: (i, 0, 0)),        # dense, unmasked out
        compiler_params=pltpu.CompilerParams(
            dimension_semantics=("parallel",),
            vmem_limit_bytes=48 * 1024 * 1024,
            allow_input_fusion=[True, False, False],
        ),
        cost_estimate=cost,
    )(x_t, w, b)

    # Flatten(0, 1): (N, 1) -> (N,).  The kernel already produced a flat dense slab; just
    # drop the padding (contiguous reshape, free).
    return y.reshape(n_pad)[:n]


if __name__ == "__main__":
    key = jax.random.PRNGKey(0)
    kx, kw, kb, kx2 = jax.random.split(key, 4)

    # Deterministic parameter init mimicking nn.Linear(3, 1):
    # uniform(-1/sqrt(3), 1/sqrt(3)) for both weight and bias.
    bound = 1.0 / jnp.sqrt(3.0)
    weight = jax.random.uniform(kw, (1, 3), jnp.float32, -bound, bound)
    bias = jax.random.uniform(kb, (1,), jnp.float32, -bound, bound)

    # Small batch (single block).
    N = 8
    x = jax.random.normal(kx, (N, 3), dtype=jnp.float32)
    out = jax.block_until_ready(transform_net_forward(x, weight, bias))
    ref = (x @ weight.T + bias).reshape(N)
    assert out.shape == (N,)
    assert jnp.allclose(out, ref, atol=1e-5, rtol=1e-5)

    # Larger, non-aligned batch forced through a multi-step parallel grid, jitted end-to-end
    # so the pad/transpose producer can fuse into the pallas operand.
    N2 = 3000
    x2 = jax.random.normal(kx2, (N2, 3), dtype=jnp.float32)
    fwd2 = jax.jit(lambda a: transform_net_forward(a, weight, bias, tile_max=1024))
    out2 = jax.block_until_ready(fwd2(x2))
    ref2 = (x2 @ weight.T + bias).reshape(N2)
    assert out2.shape == (N2,)
    assert jnp.allclose(out2, ref2, atol=1e-5, rtol=1e-5)

    print("KERNEL_OK")
</pallas_src>

<mosaic_0001>
module attributes {stable_mosaic.version = 11 : i64} {
  func.func @_linear_flatten_kernel(%arg0: i32, %arg1: memref<3x1x8x128xf32, #tpu.memory_space<vmem>>, %arg2: memref<3xf32, #tpu.memory_space<smem>>, %arg3: memref<1xf32, #tpu.memory_space<smem>>, %arg4: memref<1x8x128xf32, #tpu.memory_space<vmem>>) attributes {dimension_semantics = [#tpu.dimension_semantics<parallel>], iteration_bounds = array<i64: 1>, scalar_prefetch = 0 : i64, scratch_operands = 0 : i64, tpu.core_type = #tpu.core_type<tc>, window_params = [{transform_indices = @transform_0, window_bounds = array<i64: 3, 1, 8, 128>}, {transform_indices = @transform_1, window_bounds = array<i64: 3>}, {transform_indices = @transform_2, window_bounds = array<i64: 1>}, {transform_indices = @transform_3, window_bounds = array<i64: 1, 8, 128>}]} {
    %c0 = arith.constant 0 : index
    %0 = memref.load %arg2[%c0] : memref<3xf32, #tpu.memory_space<smem>>
    %c1 = arith.constant 1 : index
    %1 = memref.load %arg2[%c1] : memref<3xf32, #tpu.memory_space<smem>>
    %c2 = arith.constant 2 : index
    %2 = memref.load %arg2[%c2] : memref<3xf32, #tpu.memory_space<smem>>
    %c0_0 = arith.constant 0 : index
    %3 = memref.load %arg3[%c0_0] : memref<1xf32, #tpu.memory_space<smem>>
    %c0_1 = arith.constant 0 : index
    %c0_2 = arith.constant 0 : index
    %c0_3 = arith.constant 0 : index
    %c0_4 = arith.constant 0 : index
    %4 = vector.load %arg1[%c0_1, %c0_2, %c0_3, %c0_4] : memref<3x1x8x128xf32, #tpu.memory_space<vmem>>, vector<1x1x8x128xf32>
    %5 = vector.shape_cast %4 : vector<1x1x8x128xf32> to vector<8x128xf32>
    %6 = vector.broadcast %0 : f32 to vector<8x128xf32>
    %7 = arith.mulf %6, %5 : vector<8x128xf32>
    %c1_5 = arith.constant 1 : index
    %c0_6 = arith.constant 0 : index
    %c0_7 = arith.constant 0 : index
    %c0_8 = arith.constant 0 : index
    %8 = vector.load %arg1[%c1_5, %c0_6, %c0_7, %c0_8] : memref<3x1x8x128xf32, #tpu.memory_space<vmem>>, vector<1x1x8x128xf32>
    %9 = vector.shape_cast %8 : vector<1x1x8x128xf32> to vector<8x128xf32>
    %10 = vector.broadcast %1 : f32 to vector<8x128xf32>
    %11 = arith.mulf %10, %9 : vector<8x128xf32>
    %12 = arith.addf %7, %11 : vector<8x128xf32>
    %c2_9 = arith.constant 2 : index
    %c0_10 = arith.constant 0 : index
    %c0_11 = arith.constant 0 : index
    %c0_12 = arith.constant 0 : index
    %13 = vector.load %arg1[%c2_9, %c0_10, %c0_11, %c0_12] : memref<3x1x8x128xf32, #tpu.memory_space<vmem>>, vector<1x1x8x128xf32>
    %14 = vector.shape_cast %13 : vector<1x1x8x128xf32> to vector<8x128xf32>
    %15 = vector.broadcast %2 : f32 to vector<8x128xf32>
    %16 = arith.mulf %15, %14 : vector<8x128xf32>
    %17 = arith.addf %12, %16 : vector<8x128xf32>
    %18 = vector.broadcast %3 : f32 to vector<8x128xf32>
    %19 = arith.addf %17, %18 : vector<8x128xf32>
    %c0_13 = arith.constant 0 : index
    %c0_14 = arith.constant 0 : index
    %c0_15 = arith.constant 0 : index
    %20 = vector.load %arg4[%c0_13, %c0_14, %c0_15] : memref<1x8x128xf32, #tpu.memory_space<vmem>>, vector<1x8x128xf32>
    %21 = vector.shape_cast %20 : vector<1x8x128xf32> to vector<8x128xf32>
    %22 = vector.shape_cast %19 : vector<8x128xf32> to vector<1x8x128xf32>
    tpu.vector_store %arg4[%c0_13, %c0_14, %c0_15], %22 {strides = array<i32>} : memref<1x8x128xf32, #tpu.memory_space<vmem>>, vector<1x8x128xf32>,
    return
  }
  func.func @transform_0(%arg0: i32) -> (i32, i32, i32, i32) {
    %c0_i32 = arith.constant 0 : i32
    %c0_i32_0 = arith.constant 0 : i32
    %c0_i32_1 = arith.constant 0 : i32
    %c0_i32_2 = arith.constant 0 : i32
    return %c0_i32, %arg0, %c0_i32_0, %c0_i32_1 : i32, i32, i32, i32
  }
  func.func @transform_1(%arg0: i32) -> i32 {
    %c0_i32 = arith.constant 0 : i32
    %c0_i32_0 = arith.constant 0 : i32
    return %c0_i32 : i32
  }
  func.func @transform_2(%arg0: i32) -> i32 {
    %c0_i32 = arith.constant 0 : i32
    %c0_i32_0 = arith.constant 0 : i32
    return %c0_i32 : i32
  }
  func.func @transform_3(%arg0: i32) -> (i32, i32, i32) {
    %c0_i32 = arith.constant 0 : i32
    %c0_i32_0 = arith.constant 0 : i32
    %c0_i32_1 = arith.constant 0 : i32
    return %arg0, %c0_i32, %c0_i32_0 : i32, i32, i32
  }
}

</mosaic_0001>

<llo_original>
// kernel: tpu_custom_call.1
$region0: #{tpu_custom_call.1}
  #allocation0 [shape = 'u32[]', space=smem, size = 0x4, offset = 0x4, fixed_abs, tag = 'smem constant byte address 0x4 - core index']
  #allocation1 [shape = 'u32[72,128]{1,0:T(1,128)}', space=vmem, size = 0x9000, scoped, tag = 'internal scratch']
  #allocation2 [shape = 'f32[1]{0:T(128)S(6)}', space=smem, size = 0x200, scoped, tag = 'scoped memory for tpu_custom_call.1']
  %s0 = inlined_call_operand.hbm [shape: f32[3,1,8,128], index: 0, kind: input, shape index: {}]
  %s1 = inlined_call_operand.vmem [shape: f32[3], index: 1, kind: input, shape index: {}]
  %s2 = inlined_call_operand.<no memory space> [shape: f32[1], index: 2, kind: input, shape index: {}]
  %s3 = inlined_call_operand.hbm [shape: f32[1,8,128], index: 3, kind: output, shape index: {}]
  %s4 = sld [smem:[#allocation0]]
  $region30: #{tpu_custom_call.1} parent=0
    _
  %s6 = ssub.s32 1, %s4
  %s7 = scalar_select 0, %s6, %s4
  %8 = sst [smem:[#allocation2]] %s2
  $region1: #{tpu_custom_call.1} parent=0
    #allocation3 [shape = 'u8[12288]{0}', space=vmem, size = 0x3000, scoped, tag = 'input window, operand 0, single buffered']
    #allocation4 [shape = 's32[1]{0}', space=sflag, size = 0x4, scoped, tag = 'scoped memory for tpu_custom_call.1']
    #allocation5 [shape = 's32[1]{0}', space=sflag, size = 0x4, scoped, tag = 'scoped memory for tpu_custom_call.1']
    #allocation6 [shape = 's32[1]{0}', space=sflag, size = 0x4, scoped, tag = 'scoped memory for tpu_custom_call.1']
    #allocation7 [shape = 'u8[512]{0}', space=smem, size = 0x200, scoped, tag = 'input window, operand 1, single buffered']
    #allocation8 [shape = 'u8[4096]{0}', space=vmem, size = 0x1000, scoped, tag = 'output window, operand 0, single buffered']
    %9 = vsyncpa [#allocation4], 0
    %10 = vsyncpa [#allocation6], 0
    %11 = vsyncpa [#allocation5], 0
    // Predicated region
    $region2: #{tpu_custom_call.1} parent=1 // pred_check
      _
    $region3: #{tpu_custom_call.1} parent=1 // pred_check_branch
      %13 = sbr.rel (0) target = $region5
    $region4: #{tpu_custom_call.1} parent=1 // pred_region
      %15 = vsyncadd [#allocation4], 0
      %s16 = sshll.u32 %s0, 4
      %s17 = int_to_ptr.hbm [resolvable:$true] %s16
      %s18 = sshll.u32 [#allocation3], 4
      %s19 = int_to_ptr.vmem [resolvable:$true] %s18
      %24 = dma.hbm_to_vmem [thread:$0]  %s17, 384, %s19, [#allocation4], 128, 128, 8
    $region5: #{tpu_custom_call.1} parent=1 // pred_fallthru
      _
    // Predicated region
    $region6: #{tpu_custom_call.1} parent=1 // pred_check
      _
    $region7: #{tpu_custom_call.1} parent=1 // pred_check_branch
      %26 = sbr.rel (0) target = $region9
    $region8: #{tpu_custom_call.1} parent=1 // pred_region
      %28 = vsyncadd [#allocation6], 0
      %s30 = sshll.u32 %s1, 4
      %s31 = int_to_ptr.vmem [resolvable:$true] %s30
      %33 = dma.vmem_to_smem %s31, 16, [#allocation7], [#allocation6]
    $region9: #{tpu_custom_call.1} parent=1 // pred_fallthru
      _
    // Predicated region
    $region10: #{tpu_custom_call.1} parent=1 // pred_check
      _
    $region11: #{tpu_custom_call.1} parent=1 // pred_check_branch
      %35 = sbr.rel (0) target = $region13
    $region12: #{tpu_custom_call.1} parent=1 // pred_region
      _
    $region13: #{tpu_custom_call.1} parent=1 // pred_fallthru
      _
    // Predicated region
    $region14: #{tpu_custom_call.1} parent=1 // pred_check
      _
    $region15: #{tpu_custom_call.1} parent=1 // pred_check_branch
      %37 = sbr.rel (0) target = $region17
    $region16: #{tpu_custom_call.1} parent=1 // pred_region
      %39 = dma.done [#allocation4], 384
    $region17: #{tpu_custom_call.1} parent=1 // pred_fallthru
      _
    // Predicated region
    $region18: #{tpu_custom_call.1} parent=1 // pred_check
      _
    $region19: #{tpu_custom_call.1} parent=1 // pred_check_branch
      %41 = sbr.rel (0) target = $region21
    $region20: #{tpu_custom_call.1} parent=1 // pred_region
      %43 = dma.done [#allocation6], 16
    $region21: #{tpu_custom_call.1} parent=1 // pred_fallthru
      _
    %44 = sfence
    %s45 = sld [smem:[#allocation7]]
    %s46 = sld [smem:[#allocation7 + $0x1]]
    %s47 = sld [smem:[#allocation7 + $0x2]]
    %s48 = sld [smem:[#allocation2]]
    %v49 = vld [vmem:[#allocation3] sm:$0xff]
    %v50 = vstv %s45
    %v51 = vmul.f32 %v50, %v49
    %s52 = scalar_lea.vmem [#allocation3], 8
    %v53 = vld [vmem:[%s52] sm:$0xff]
    %v54 = vstv %s46
    %v55 = vmul.f32 %v54, %v53
    %v56 = vadd.f32 %v51, %v55
    %s57 = scalar_lea.vmem [#allocation3], 16
    %v58 = vld [vmem:[%s57] sm:$0xff]
    %v59 = vstv %s47
    %v60 = vmul.f32 %v59, %v58
    %v61 = vadd.f32 %v56, %v60
    %v62 = vstv %s48
    %v63 = vadd.f32 %v61, %v62
    %64 = vst [vmem:[#allocation8] sm:$0xff] %v63
    // Predicated region
    $region22: #{tpu_custom_call.1} parent=1 // pred_check
      _
    $region23: #{tpu_custom_call.1} parent=1 // pred_check_branch
      %66 = sbr.rel (0) target = $region25
    $region24: #{tpu_custom_call.1} parent=1 // pred_region
      %68 = vsyncadd [#allocation5], 0
      %s70 = sshll.u32 [#allocation8], 4
      %s71 = int_to_ptr.vmem [resolvable:$true] %s70
      %s72 = sshll.u32 %s3, 4
      %s73 = int_to_ptr.hbm [resolvable:$true] %s72
      %75 = dma.vmem_to_hbm [thread:$0]  %s71, 128, %s73, [#allocation5]
    $region25: #{tpu_custom_call.1} parent=1 // pred_fallthru
      _
    // Predicated region
    $region26: #{tpu_custom_call.1} parent=1 // pred_check
      _
    $region27: #{tpu_custom_call.1} parent=1 // pred_check_branch
      %77 = sbr.rel (0) target = $region29
    $region28: #{tpu_custom_call.1} parent=1 // pred_region
      %79 = dma.done [#allocation5], 128
    $region29: #{tpu_custom_call.1} parent=1 // pred_fallthru
      _
    %80 = vsyncpa [#allocation4], 1
    %81 = vsyncpa [#allocation5], 1
    %82 = vsyncpa [#allocation6], 1

</llo_original>
